<compile_context>
chip_gen: v5e
topology: v5e:2x2
jax: 0.10.0
libtpu: 0.0.40
codegen_flags: <defaults>
</compile_context>

<pallas_src>
import jax
import jax.numpy as jnp
from jax.experimental import pallas as pl
from jax.experimental.pallas import tpu as pltpu


def _se_kernel(x_ref, w1t_ref, w2t_ref, o_ref):
    # x_ref / o_ref block: (Bt, C, HW); w1t: (C, Cr); w2t: (Cr, C)
    x = x_ref[...]                                   # (Bt, C, HW), input dtype
    inv_hw = jnp.float32(1.0 / x.shape[-1])

    # Squeeze: per-(batch, channel) mean over spatial lanes, accumulated in f32.
    y = jnp.sum(x, axis=-1, dtype=jnp.float32) * inv_hw          # (Bt, C)

    # Excitation: two bias-free linears, ReLU then sigmoid (tiny matvecs).
    h = jnp.dot(y, w1t_ref[...].astype(jnp.float32),
                preferred_element_type=jnp.float32)              # (Bt, Cr)
    h = jnp.maximum(h, 0.0)
    s = jnp.dot(h, w2t_ref[...].astype(jnp.float32),
                preferred_element_type=jnp.float32)              # (Bt, C)
    s = jax.nn.sigmoid(s)

    # Scale: broadcast per-channel gate across all spatial positions (lanes),
    # keeping the large tile in its original dtype.
    o_ref[...] = (x * s.astype(x.dtype)[:, :, None]).astype(o_ref.dtype)


def _pick_batch_tile(B, C, HW, itemsize, budget_bytes=6 * 2**20):
    """Largest divisor of B whose block fits the VMEM budget.

    Live VMEM ~= 2 (double-buffer) * (input block + output block)
              = 4 * Bt * C * HW * itemsize, so keep a single block <= budget.
    Also keep >= 2 grid steps when possible so v7x can use both TensorCores.
    """
    cap = max(1, budget_bytes // max(1, C * HW * itemsize))
    if B >= 2:
        cap = min(cap, max(1, B // 2))
    cap = min(cap, B)
    for bt in range(cap, 0, -1):
        if B % bt == 0:
            return bt
    return 1


def se_attention(x_nchw, w1, w2):
    """x_nchw: (B, C, H, W); w1: (C//r, C); w2: (C, C//r). Returns (B, C, H, W)."""
    B, C, H, W = x_nchw.shape
    HW = H * W
    Cr = w1.shape[0]
    assert w1.shape == (Cr, C) and w2.shape == (C, Cr)

    # Free reshape only — no transpose passes over x.
    x_bchw = x_nchw.reshape(B, C, HW)
    w1t = w1.T  # (C, Cr)  tiny, one-time
    w2t = w2.T  # (Cr, C)  tiny, one-time

    itemsize = jnp.dtype(x_nchw.dtype).itemsize
    Bt = _pick_batch_tile(B, C, HW, itemsize)
    grid = (B // Bt,)

    out_bchw = pl.pallas_call(
        _se_kernel,
        out_shape=jax.ShapeDtypeStruct((B, C, HW), x_nchw.dtype),
        grid_spec=pltpu.PrefetchScalarGridSpec(
            num_scalar_prefetch=0,
            grid=grid,
            in_specs=[
                pl.BlockSpec((Bt, C, HW), lambda b: (b, 0, 0)),
                pl.BlockSpec((C, Cr), lambda b: (0, 0)),
                pl.BlockSpec((Cr, C), lambda b: (0, 0)),
            ],
            out_specs=pl.BlockSpec((Bt, C, HW), lambda b: (b, 0, 0)),
        ),
        compiler_params=pltpu.CompilerParams(
            dimension_semantics=("parallel",),
        ),
    )(x_bchw, w1t, w2t)

    return out_bchw.reshape(B, C, H, W)


def se_attention_ref(x_nchw, w1, w2):
    """Pure-JAX reference mirroring the PyTorch forward."""
    y = jnp.mean(x_nchw, axis=(2, 3))                 # (B, C)
    y = jnp.maximum(y @ w1.T, 0.0)                    # (B, Cr)
    y = jax.nn.sigmoid(y @ w2.T)                      # (B, C)
    return x_nchw * y[:, :, None, None]


if __name__ == "__main__":
    # Small, TPU-friendly shapes consistent with SEAttention(channel=C, reduction=16)
    B, C, H, W = 2, 128, 8, 8
    reduction = 16
    Cr = C // reduction

    key = jax.random.PRNGKey(0)
    kx, k1, k2 = jax.random.split(key, 3)
    x = jax.random.normal(kx, (B, C, H, W), dtype=jnp.float32)
    # Deterministic synthetic weights (matches init_weights std=0.001 style)
    w1 = 0.001 * jax.random.normal(k1, (Cr, C), dtype=jnp.float32)  # fc[0].weight
    w2 = 0.001 * jax.random.normal(k2, (C, Cr), dtype=jnp.float32)  # fc[2].weight

    out = jax.block_until_ready(se_attention(x, w1, w2))
    ref = se_attention_ref(x, w1, w2)

    assert out.shape == (B, C, H, W)
    assert jnp.allclose(out, ref, atol=1e-5, rtol=1e-5), "mismatch vs reference"

    print("KERNEL_OK")
</pallas_src>

<mosaic_0001>
module attributes {stable_mosaic.version = 11 : i64} {
  func.func @_se_kernel(%arg0: i32, %arg1: memref<1x128x64xf32, #tpu.memory_space<vmem>>, %arg2: memref<128x8xf32, #tpu.memory_space<vmem>>, %arg3: memref<8x128xf32, #tpu.memory_space<vmem>>, %arg4: memref<1x128x64xf32, #tpu.memory_space<vmem>>) attributes {dimension_semantics = [#tpu.dimension_semantics<parallel>], iteration_bounds = array<i64: 2>, scalar_prefetch = 0 : i64, scratch_operands = 0 : i64, tpu.core_type = #tpu.core_type<tc>, window_params = [{transform_indices = @transform_0, window_bounds = array<i64: 1, 128, 64>}, {pipeline_mode = #tpu.pipeline_mode<synchronous>, transform_indices = @transform_1, window_bounds = array<i64: 128, 8>}, {pipeline_mode = #tpu.pipeline_mode<synchronous>, transform_indices = @transform_2, window_bounds = array<i64: 8, 128>}, {transform_indices = @transform_3, window_bounds = array<i64: 1, 128, 64>}]} {
    %c0 = arith.constant 0 : index
    %c0_0 = arith.constant 0 : index
    %c0_1 = arith.constant 0 : index
    %0 = vector.load %arg1[%c0, %c0_0, %c0_1] : memref<1x128x64xf32, #tpu.memory_space<vmem>>, vector<1x128x64xf32>
    %cst = arith.constant dense<0.000000e+00> : vector<1x128xf32>
    %1 = vector.multi_reduction <add>, %0, %cst [2] : vector<1x128x64xf32> to vector<1x128xf32>
    %cst_2 = arith.constant 1.562500e-02 : f32
    %2 = vector.broadcast %cst_2 : f32 to vector<1x128xf32>
    %3 = arith.mulf %1, %2 : vector<1x128xf32>
    %c0_3 = arith.constant 0 : index
    %c0_4 = arith.constant 0 : index
    %4 = vector.load %arg2[%c0_3, %c0_4] : memref<128x8xf32, #tpu.memory_space<vmem>>, vector<128x8xf32>
    %cst_5 = arith.constant dense<0.000000e+00> : vector<1x8xf32>
    %5 = tpu.matmul %3, %4, %cst_5 {dimension_numbers = #tpu.dot_dimension_numbers<[1], [0], [0], [1], [0, 0, 1, 1], [], []>} : vector<1x128xf32>, vector<128x8xf32>, vector<1x8xf32> -> vector<1x8xf32>
    %cst_6 = arith.constant 0.000000e+00 : f32
    %6 = vector.broadcast %cst_6 : f32 to vector<1x8xf32>
    %7 = arith.maximumf %5, %6 : vector<1x8xf32>
    %c0_7 = arith.constant 0 : index
    %c0_8 = arith.constant 0 : index
    %8 = vector.load %arg3[%c0_7, %c0_8] : memref<8x128xf32, #tpu.memory_space<vmem>>, vector<8x128xf32>
    %cst_9 = arith.constant dense<0.000000e+00> : vector<1x128xf32>
    %9 = tpu.matmul %7, %8, %cst_9 {dimension_numbers = #tpu.dot_dimension_numbers<[1], [0], [0], [1], [0, 0, 1, 1], [], []>} : vector<1x8xf32>, vector<8x128xf32>, vector<1x128xf32> -> vector<1x128xf32>
    %10 = arith.negf %9 : vector<1x128xf32>
    %11 = math.exp %10 : vector<1x128xf32>
    %cst_10 = arith.constant 1.000000e+00 : f32
    %12 = vector.broadcast %cst_10 : f32 to vector<1x128xf32>
    %13 = arith.addf %12, %11 : vector<1x128xf32>
    %14 = arith.divf %12, %13 : vector<1x128xf32>
    %15 = vector.shape_cast %14 : vector<1x128xf32> to vector<1x128x1xf32>
    %16 = vector.broadcast %15 : vector<1x128x1xf32> to vector<1x128x64xf32>
    %17 = arith.mulf %0, %16 : vector<1x128x64xf32>
    %c0_11 = arith.constant 0 : index
    %c0_12 = arith.constant 0 : index
    %c0_13 = arith.constant 0 : index
    %18 = vector.load %arg4[%c0_11, %c0_12, %c0_13] : memref<1x128x64xf32, #tpu.memory_space<vmem>>, vector<1x128x64xf32>
    tpu.vector_store %arg4[%c0_11, %c0_12, %c0_13], %17 {strides = array<i32>} : memref<1x128x64xf32, #tpu.memory_space<vmem>>, vector<1x128x64xf32>,
    return
  }
  func.func @transform_0(%arg0: i32) -> (i32, i32, i32) {
    %c0_i32 = arith.constant 0 : i32
    %c0_i32_0 = arith.constant 0 : i32
    %c0_i32_1 = arith.constant 0 : i32
    return %arg0, %c0_i32, %c0_i32_0 : i32, i32, i32
  }
  func.func @transform_1(%arg0: i32) -> (i32, i32) {
    %c0_i32 = arith.constant 0 : i32
    %c0_i32_0 = arith.constant 0 : i32
    %c0_i32_1 = arith.constant 0 : i32
    return %c0_i32, %c0_i32_0 : i32, i32
  }
  func.func @transform_2(%arg0: i32) -> (i32, i32) {
    %c0_i32 = arith.constant 0 : i32
    %c0_i32_0 = arith.constant 0 : i32
    %c0_i32_1 = arith.constant 0 : i32
    return %c0_i32, %c0_i32_0 : i32, i32
  }
  func.func @transform_3(%arg0: i32) -> (i32, i32, i32) {
    %c0_i32 = arith.constant 0 : i32
    %c0_i32_0 = arith.constant 0 : i32
    %c0_i32_1 = arith.constant 0 : i32
    return %arg0, %c0_i32, %c0_i32_0 : i32, i32, i32
  }
}

</mosaic_0001>

<llo_original>
// kernel: tpu_custom_call.1
$region0: #{tpu_custom_call.1}
  #allocation0 [shape = 'u32[]', space=smem, size = 0x4, offset = 0x4, fixed_abs, tag = 'smem constant byte address 0x4 - core index']
  #allocation1 [shape = 'u32[72,128]{1,0:T(1,128)}', space=vmem, size = 0x9000, scoped, tag = 'internal scratch']
  %s0 = inlined_call_operand.vmem [shape: f32[2,128,64], index: 0, kind: input, shape index: {}]
  %s1 = inlined_call_operand.vmem [shape: f32[128,8], index: 1, kind: input, shape index: {}]
  %s2 = inlined_call_operand.vmem [shape: f32[8,128], index: 2, kind: input, shape index: {}]
  %s3 = inlined_call_operand.vmem [shape: f32[2,128,64], index: 3, kind: output, shape index: {}]
  %s4 = sld [smem:[#allocation0]]
  $region45: #{tpu_custom_call.1} parent=0
    _
  %s6 = ssub.s32 1, %s4
  %s7 = scalar_select 0, %s6, %s4
  loop: start=0, step=1, limit=4
  $region2: #{tpu_custom_call.1} parent=0 // loop_pre_header
    _
  $region3: #{tpu_custom_call.1} parent=0 // loop_header
    %s9 = sphi 0, %s13
    %p10 = scmp.ge.s32.totalorder %s9, 4
    %s19 = sphi 0, %s21
    %s22 = sphi 0, %s19
    %s23 = sphi 0, %s22
    %s39 = sphi 0, %s23
    %s43 = sphi 0, %s43
    %s45 = sphi 0, %s43
    %s46 = sphi 0, %s45
    %s60 = sphi 0, %s46
    %s64 = sphi 0, %s64
    %s66 = sphi 0, %s64
    %s67 = sphi 0, %s66
    %s81 = sphi 0, %s67
    %s87 = sphi 0, %s89
    %s90 = sphi 0, %s87
    %s91 = sphi 0, %s90
    %s107 = sphi 0, %s91
  $region4: #{tpu_custom_call.1} parent=0 // loop_header_branch
    %12 = sbr.rel (%p10) target = $region8
  $region5: #{tpu_custom_call.1} parent=0 // loop_body
    %s14 = ssub.s32 %s9, 1
    %s15 = ssub.s32 %s9, 2
    %s16 = sadd.s32 %s9, 1
    %s17 = ssub.s32 %s9, %s16
    %p18 = scmp.eq.s32.totalorder %s17, 0
    %s20 = sadd.s32 %s19, 1
    %s21 = scalar_select %p18, %s19, %s20
    %p24 = pneg %p18
    %p25 = scmp.eq.s32.totalorder %s9, 1
    %p26 = por %p24, %p25
    %p27 = scmp.ne.s32.totalorder %s19, %s22
    %p28 = scmp.eq.s32.totalorder %s9, 0
    %p29 = por %p27, %p28
    %p30 = scmp.ne.s32.totalorder %s19, %s22
    %p31 = scmp.eq.s32.totalorder %s14, 1
    %p32 = por %p30, %p31
    %p33 = scmp.ne.s32.totalorder %s22, %s23
    %p34 = scmp.eq.s32.totalorder %s14, 0
    %p35 = por %p33, %p34
    %p36 = scmp.ne.s32.totalorder %s22, %s23
    %p37 = scmp.eq.s32.totalorder %s15, 1
    %p38 = por %p36, %p37
    %p40 = scmp.ne.s32.totalorder %s23, %s39
    %p41 = scmp.eq.s32.totalorder %s15, 0
    %p42 = por %p40, %p41
    %s44 = sadd.s32 %s43, 1
    %p47 = scmp.eq.s32.totalorder %s9, 1
    %p48 = scmp.ne.s32.totalorder %s43, %s45
    %p49 = scmp.eq.s32.totalorder %s9, 0
    %p50 = por %p48, %p49
    %p51 = scmp.ne.s32.totalorder %s43, %s45
    %p52 = scmp.eq.s32.totalorder %s14, 1
    %p53 = por %p51, %p52
    %p54 = scmp.ne.s32.totalorder %s45, %s46
    %p55 = scmp.eq.s32.totalorder %s14, 0
    %p56 = por %p54, %p55
    %p57 = scmp.ne.s32.totalorder %s45, %s46
    %p58 = scmp.eq.s32.totalorder %s15, 1
    %p59 = por %p57, %p58
    %p61 = scmp.ne.s32.totalorder %s46, %s60
    %p62 = scmp.eq.s32.totalorder %s15, 0
    %p63 = por %p61, %p62
    %s65 = sadd.s32 %s64, 1
    %p68 = scmp.eq.s32.totalorder %s9, 1
    %p69 = scmp.ne.s32.totalorder %s64, %s66
    %p70 = scmp.eq.s32.totalorder %s9, 0
    %p71 = por %p69, %p70
    %p72 = scmp.ne.s32.totalorder %s64, %s66
    %p73 = scmp.eq.s32.totalorder %s14, 1
    %p74 = por %p72, %p73
    %p75 = scmp.ne.s32.totalorder %s66, %s67
    %p76 = scmp.eq.s32.totalorder %s14, 0
    %p77 = por %p75, %p76
    %p78 = scmp.ne.s32.totalorder %s66, %s67
    %p79 = scmp.eq.s32.totalorder %s15, 1
    %p80 = por %p78, %p79
    %p82 = scmp.ne.s32.totalorder %s67, %s81
    %p83 = scmp.eq.s32.totalorder %s15, 0
    %p84 = por %p82, %p83
    %s85 = ssub.s32 %s9, %s16
    %p86 = scmp.eq.s32.totalorder %s85, 0
    %s88 = sadd.s32 %s87, 1
    %s89 = scalar_select %p86, %s87, %s88
    %p92 = pneg %p86
    %p93 = scmp.eq.s32.totalorder %s9, 1
    %p94 = por %p92, %p93
    %p95 = scmp.ne.s32.totalorder %s87, %s90
    %p96 = scmp.eq.s32.totalorder %s9, 0
    %p97 = por %p95, %p96
    %p98 = scmp.ne.s32.totalorder %s87, %s90
    %p99 = scmp.eq.s32.totalorder %s14, 1
    %p100 = por %p98, %p99
    %p101 = scmp.ne.s32.totalorder %s90, %s91
    %p102 = scmp.eq.s32.totalorder %s14, 0
    %p103 = por %p101, %p102
    %p104 = scmp.ne.s32.totalorder %s90, %s91
    %p105 = scmp.eq.s32.totalorder %s15, 1
    %p106 = por %p104, %p105
    %p108 = scmp.ne.s32.totalorder %s91, %s107
    %p109 = scmp.eq.s32.totalorder %s15, 0
    %p110 = por %p108, %p109
    %p111 = scmp.le.s32.totalorder 1, %s9
    %p112 = scmp.lt.s32.totalorder %s9, 3
    %p113 = pnand %p111, %p112
    %p114 = pneg %p113
    // Predicated region
    $region9: #{tpu_custom_call.1} parent=5 // pred_check
      _
    $region10: #{tpu_custom_call.1} parent=5 // pred_check_branch
      %116 = sbr.rel (%p113) target = $region12
    $region11: #{tpu_custom_call.1} parent=5 // pred_region
      %s117 = ssub.s32 %s9, 1
      // Predicated region
      $region13: #{tpu_custom_call.1} parent=11 // pred_check
        %p118 = pneg %p56
      $region14: #{tpu_custom_call.1} parent=11 // pred_check_branch
        %120 = sbr.rel (%p118) target = $region16
      $region15: #{tpu_custom_call.1} parent=11 // pred_region
        _
      $region16: #{tpu_custom_call.1} parent=11 // pred_fallthru
        _
      // Predicated region
      $region17: #{tpu_custom_call.1} parent=11 // pred_check
        %p121 = pneg %p77
      $region18: #{tpu_custom_call.1} parent=11 // pred_check_branch
        %123 = sbr.rel (%p121) target = $region20
      $region19: #{tpu_custom_call.1} parent=11 // pred_region
        _
      $region20: #{tpu_custom_call.1} parent=11 // pred_fallthru
        _
    $region12: #{tpu_custom_call.1} parent=5 // pred_fallthru
      _
    %p124 = scmp.lt.s32.totalorder %s9, 2
    // Predicated region
    $region21: #{tpu_custom_call.1} parent=5 // pred_check
      %p125 = pneg %p124
    $region22: #{tpu_custom_call.1} parent=5 // pred_check_branch
      %127 = sbr.rel (%p125) target = $region24
    $region23: #{tpu_custom_call.1} parent=5 // pred_region
      // Predicated region
      $region25: #{tpu_custom_call.1} parent=23 // pred_check
        %p128 = pneg %p29
      $region26: #{tpu_custom_call.1} parent=23 // pred_check_branch
        %130 = sbr.rel (%p128) target = $region28
      $region27: #{tpu_custom_call.1} parent=23 // pred_region
        %p131 = scmp.lt.s32.totalorder %s9, 1
        %s132 = scalar_select %p131, %s9, 1
        %s133 = smul.addr %s132, 16
        %s134 = smul.addr %s133, 8
        %s135 = scalar_lea.vmem %s0, %s134
      $region28: #{tpu_custom_call.1} parent=23 // pred_fallthru
        _
    $region24: #{tpu_custom_call.1} parent=5 // pred_fallthru
      _
    %p136 = scmp.le.s32.totalorder 1, %s9
    %p137 = scmp.lt.s32.totalorder %s9, 3
    %p138 = pnand %p136, %p137
    %p139 = pneg %p138
    // Predicated region
    $region29: #{tpu_custom_call.1} parent=5 // pred_check
      _
    $region30: #{tpu_custom_call.1} parent=5 // pred_check_branch
      %141 = sbr.rel (%p138) target = $region32
    $region31: #{tpu_custom_call.1} parent=5 // pred_region
      %s142 = ssub.s32 %s9, 1
      %p143 = scmp.lt.s32.totalorder %s14, 1
      %s144 = scalar_select %p143, %s14, 1
      %s145 = smul.addr %s144, 16
      %s146 = smul.addr %s145, 8
      %s147 = scalar_lea.vmem %s0, %s146
      %p148 = pneg %p35
      %p149 = pneg %p32
      %p150 = pneg %p56
      %p151 = pneg %p53
      %p152 = pneg %p77
      %p153 = pneg %p74
      %p154 = pneg %p103
      %p155 = pneg %p100
      %p156 = scmp.lt.s32.totalorder %s14, 1
      %s157 = scalar_select %p156, %s14, 1
      %s158 = smul.addr %s157, 16
      %s159 = smul.addr %s158, 8
      %s160 = scalar_lea.vmem %s3, %s159
      %p161 = scmp.lt.s32.totalorder %s14, 1
      %s162 = scalar_select %p161, %s14, 1
      %s163 = smul.addr %s162, 16
      %s164 = smul.addr %s163, 8
      %s165 = scalar_lea.vmem %s0, %s164
      %p166 = scmp.lt.s32.totalorder %s14, 1
      %s167 = scalar_select %p166, %s14, 1
      %s168 = smul.addr %s167, 16
      %s169 = smul.addr %s168, 8
      %s170 = scalar_lea.vmem %s3, %s169
      %v171 = vld [vmem:[%s165] sm:$0xff]
      %v172 = vld [vmem:[%s165 + $0x8] sm:$0xff]
      %v173 = vld [vmem:[%s165 + $0x10] sm:$0xff]
      %v174 = vld [vmem:[%s165 + $0x18] sm:$0xff]
      %v175 = vld [vmem:[%s165 + $0x20] sm:$0xff]
      %v176 = vld [vmem:[%s165 + $0x28] sm:$0xff]
      %v177 = vld [vmem:[%s165 + $0x30] sm:$0xff]
      %v178 = vld [vmem:[%s165 + $0x38] sm:$0xff]
      %v179 = vld [vmem:[%s165 + $0x40] sm:$0xff]
      %v180 = vld [vmem:[%s165 + $0x48] sm:$0xff]
      %v181 = vld [vmem:[%s165 + $0x50] sm:$0xff]
      %v182 = vld [vmem:[%s165 + $0x58] sm:$0xff]
      %v183 = vld [vmem:[%s165 + $0x60] sm:$0xff]
      %v184 = vld [vmem:[%s165 + $0x68] sm:$0xff]
      %v185 = vld [vmem:[%s165 + $0x70] sm:$0xff]
      %v186 = vld [vmem:[%s165 + $0x78] sm:$0xff]
      %vm187 = vcmask 523264
      %v188 = vsel %vm187, %v171, 0.0
      %189 = vadd.xlane.f32.xlu0 %v188
      %v190 = vpop.xlane.xlu0 %189
      %v191 = vsel %vm187, %v172, 0.0
      %192 = vadd.xlane.f32.xlu0 %v191
      %v193 = vpop.xlane.xlu0 %192
      %v194 = vsel %vm187, %v173, 0.0
      %195 = vadd.xlane.f32.xlu0 %v194
      %v196 = vpop.xlane.xlu0 %195
      %v197 = vsel %vm187, %v174, 0.0
      %198 = vadd.xlane.f32.xlu0 %v197
      %v199 = vpop.xlane.xlu0 %198
      %v200 = vsel %vm187, %v175, 0.0
      %201 = vadd.xlane.f32.xlu0 %v200
      %v202 = vpop.xlane.xlu0 %201
      %v203 = vsel %vm187, %v176, 0.0
      %204 = vadd.xlane.f32.xlu0 %v203
      %v205 = vpop.xlane.xlu0 %204
      %v206 = vsel %vm187, %v177, 0.0
      %207 = vadd.xlane.f32.xlu0 %v206
      %v208 = vpop.xlane.xlu0 %207
      %v209 = vsel %vm187, %v178, 0.0
      %210 = vadd.xlane.f32.xlu0 %v209
      %v211 = vpop.xlane.xlu0 %210
      %v212 = vsel %vm187, %v179, 0.0
      %213 = vadd.xlane.f32.xlu0 %v212
      %v214 = vpop.xlane.xlu0 %213
      %v215 = vsel %vm187, %v180, 0.0
      %216 = vadd.xlane.f32.xlu0 %v215
      %v217 = vpop.xlane.xlu0 %216
      %v218 = vsel %vm187, %v181, 0.0
      %219 = vadd.xlane.f32.xlu0 %v218
      %v220 = vpop.xlane.xlu0 %219
      %v221 = vsel %vm187, %v182, 0.0
      %222 = vadd.xlane.f32.xlu0 %v221
      %v223 = vpop.xlane.xlu0 %222
      %v224 = vsel %vm187, %v183, 0.0
      %225 = vadd.xlane.f32.xlu0 %v224
      %v226 = vpop.xlane.xlu0 %225
      %v227 = vsel %vm187, %v184, 0.0
      %228 = vadd.xlane.f32.xlu0 %v227
      %v229 = vpop.xlane.xlu0 %228
      %v230 = vsel %vm187, %v185, 0.0
      %231 = vadd.xlane.f32.xlu0 %v230
      %v232 = vpop.xlane.xlu0 %231
      %v233 = vsel %vm187, %v186, 0.0
      %234 = vadd.xlane.f32.xlu0 %v233
      %v235 = vpop.xlane.xlu0 %234
      %v236 = vmul.f32 %v190, 0.015625
      %v237 = vmul.f32 %v193, 0.015625
      %v238 = vmul.f32 %v196, 0.015625
      %v239 = vmul.f32 %v199, 0.015625
      %v240 = vmul.f32 %v202, 0.015625
      %v241 = vmul.f32 %v205, 0.015625
      %v242 = vmul.f32 %v208, 0.015625
      %v243 = vmul.f32 %v211, 0.015625
      %v244 = vmul.f32 %v214, 0.015625
      %v245 = vmul.f32 %v217, 0.015625
      %v246 = vmul.f32 %v220, 0.015625
      %v247 = vmul.f32 %v223, 0.015625
      %v248 = vmul.f32 %v226, 0.015625
      %v249 = vmul.f32 %v229, 0.015625
      %v250 = vmul.f32 %v232, 0.015625
      %v251 = vmul.f32 %v235, 0.015625
      %v252 = vld [vmem:[%s1] sm:$0xff]
      %v253 = vld [vmem:[%s1 + $0x8] sm:$0xff]
      %v254 = vld [vmem:[%s1 + $0x10] sm:$0xff]
      %v255 = vld [vmem:[%s1 + $0x18] sm:$0xff]
      %v256 = vld [vmem:[%s1 + $0x20] sm:$0xff]
      %v257 = vld [vmem:[%s1 + $0x28] sm:$0xff]
      %v258 = vld [vmem:[%s1 + $0x30] sm:$0xff]
      %v259 = vld [vmem:[%s1 + $0x38] sm:$0xff]
      %v260 = vld [vmem:[%s1 + $0x40] sm:$0xff]
      %v261 = vld [vmem:[%s1 + $0x48] sm:$0xff]
      %v262 = vld [vmem:[%s1 + $0x50] sm:$0xff]
      %v263 = vld [vmem:[%s1 + $0x58] sm:$0xff]
      %v264 = vld [vmem:[%s1 + $0x60] sm:$0xff]
      %v265 = vld [vmem:[%s1 + $0x68] sm:$0xff]
      %v266 = vld [vmem:[%s1 + $0x70] sm:$0xff]
      %v267 = vld [vmem:[%s1 + $0x78] sm:$0xff]
      %v284 = vlaneseq
      %v285 = vand.u32 %v284, 127
      %v286 = vperm.slane %v236, %v285
      %v287 = vadd.s32 %v285, 4294967288
      %v288 = vperm.slane %v237, %v287
      %vm289 = vcmask 130112
      %v290 = vsel %vm289, %v288, %v286
      %v291 = vadd.s32 %v285, 4294967280
      %v292 = vperm.slane %v238, %v291
      %vm293 = vcmask 195712
      %v294 = vsel %vm293, %v292, %v290
      %v295 = vadd.s32 %v285, 4294967272
      %v296 = vperm.slane %v239, %v295
      %vm297 = vcmask 261312
      %v298 = vsel %vm297, %v296, %v294
      %v299 = vadd.s32 %v285, 4294967264
      %v300 = vperm.slane %v240, %v299
      %vm301 = vcmask 326912
      %v302 = vsel %vm301, %v300, %v298
      %v303 = vadd.s32 %v285, 4294967256
      %v304 = vperm.slane %v241, %v303
      %vm305 = vcmask 392512
      %v306 = vsel %vm305, %v304, %v302
      %v307 = vadd.s32 %v285, 4294967248
      %v308 = vperm.slane %v242, %v307
      %vm309 = vcmask 458112
      %v310 = vsel %vm309, %v308, %v306
      %v311 = vadd.s32 %v285, 4294967240
      %v312 = vperm.slane %v243, %v311
      %vm313 = vcmask 523712
      %v314 = vsel %vm313, %v312, %v310
      %v315 = vadd.s32 %v285, 4294967232
      %v316 = vperm.slane %v244, %v315
      %vm317 = vcmask 589312
      %v318 = vsel %vm317, %v316, %v314
      %v319 = vadd.s32 %v285, 4294967224
      %v320 = vperm.slane %v245, %v319
      %vm321 = vcmask 654912
      %v322 = vsel %vm321, %v320, %v318
      %v323 = vadd.s32 %v285, 4294967216
      %v324 = vperm.slane %v246, %v323
      %vm325 = vcmask 720512
      %v326 = vsel %vm325, %v324, %v322
      %v327 = vadd.s32 %v285, 4294967208
      %v328 = vperm.slane %v247, %v327
      %vm329 = vcmask 786112
      %v330 = vsel %vm329, %v328, %v326
      %v331 = vadd.s32 %v285, 4294967200
      %v332 = vperm.slane %v248, %v331
      %vm333 = vcmask 851712
      %v334 = vsel %vm333, %v332, %v330
      %v335 = vadd.s32 %v285, 4294967192
      %v336 = vperm.slane %v249, %v335
      %vm337 = vcmask 917312
      %v338 = vsel %vm337, %v336, %v334
      %v339 = vadd.s32 %v285, 4294967184
      %v340 = vperm.slane %v250, %v339
      %vm341 = vcmask 982912
      %v342 = vsel %vm341, %v340, %v338
      %v343 = vadd.s32 %v285, 4294967176
      %v344 = vperm.slane %v251, %v343
      %vm345 = vcmask 1048512
      %v346 = vsel %vm345, %v344, %v342
      %348 = vmatpush.msra.mxu0 %v267
      %349 = vmatpush.msra.mxu0 %v266
      %350 = vmatpush.msra.mxu0 %v265
      %351 = vmatpush.msra.mxu0 %v264
      %352 = vmatpush.msra.mxu0 %v263
      %353 = vmatpush.msra.mxu0 %v262
      %354 = vmatpush.msra.mxu0 %v261
      %355 = vmatpush.msra.mxu0 %v260
      %356 = vmatpush.msra.mxu0 %v259
      %357 = vmatpush.msra.mxu0 %v258
      %358 = vmatpush.msra.mxu0 %v257
      %359 = vmatpush.msra.mxu0 %v256
      %360 = vmatpush.msra.mxu0 %v255
      %361 = vmatpush.msra.mxu0 %v254
      %362 = vmatpush.msra.mxu0 %v253
      %363 = vmatpush.msra.mxu0 %v252
      %364 = vmatmul.f32.gmra.mxu0 %v346
      %v365 = vpop.f32.mrf.mxu0
      %v366 = vadd.f32 0.0, %v365
      %367 = vdwg.mxu0
      %v368 = vmax.f32 %v366, 0.0
      %v369 = vld [vmem:[%s2] sm:$0xff]
      %vm370 = vcmask 64512
      %v372 = vsel %vm370, %v368, 0
      %374 = vmatpush.msra.mxu0 0.0
      %375 = vmatpush.msra.mxu0 0.0
      %376 = vmatpush.msra.mxu0 0.0
      %377 = vmatpush.msra.mxu0 0.0
      %378 = vmatpush.msra.mxu0 0.0
      %379 = vmatpush.msra.mxu0 0.0
      %380 = vmatpush.msra.mxu0 0.0
      %381 = vmatpush.msra.mxu0 0.0
      %382 = vmatpush.msra.mxu0 0.0
      %383 = vmatpush.msra.mxu0 0.0
      %384 = vmatpush.msra.mxu0 0.0
      %385 = vmatpush.msra.mxu0 0.0
      %386 = vmatpush.msra.mxu0 0.0
      %387 = vmatpush.msra.mxu0 0.0
      %388 = vmatpush.msra.mxu0 0.0
      %389 = vmatpush.msra.mxu0 %v369
      %390 = vmatmul.f32.gmra.mxu0 %v372
      %v391 = vpop.f32.mrf.mxu0
      %v392 = vadd.f32 0.0, %v391
      %393 = vdwg.mxu0
      %v394 = vxor.u32 %v392, 2147483648
      %v395 = vmul.f32 %v394, 1.442695
      %v396 = vpow.pop %v395
      %v397 = vadd.f32 %v396, 1.0
      %v398 = vrcp.pop %v397
      %v399 = vmul.f32 %v397, %v398
      %v400 = vsub.f32 1.0, %v399
      %v401 = vmul.f32 %v398, %v400
      %v402 = vadd.f32 %v398, %v401
      %vm403 = vweird.f32 %v397
      %vm404 = vweird.f32 %v398
      %vm405 = vmor %vm403, %vm404
      %v406 = vsel %vm405, %v398, %v402
      %v407 = vand.u32 2147483647, %v397
      %vm408 = vcmp.eq.f32.partialorder %v407, 8.507059e+37
      %v409 = vand.u32 %v397, 2147483648
      %v410 = vor.u32 1.1754944e-38, %v409
      %v411 = vsel %vm408, %v410, %v406
      %v412 = vmul.f32 1.0, %v411
      %v413 = vperm.slane %v412, 0
      %v414 = vlaneseq
      %v415 = vshrl.u32 %v414, 7
      %417 = vset.pattern.permute.xlu0 %v415
      %418 = vperm.xlu0 %417, %v413
      %v419 = vpop.permute.xlu0 %418
      %v420 = vlaneseq
      %v421 = vshrl.u32 %v420, 7
      %v422 = vadd.s32 %v421, 8
      %423 = vset.pattern.permute.xlu0 %v422
      %424 = vperm.xlu0 %423, %v413
      %v425 = vpop.permute.xlu0 %424
      %v426 = vlaneseq
      %v427 = vshrl.u32 %v426, 7
      %v428 = vadd.s32 %v427, 16
      %429 = vset.pattern.permute.xlu0 %v428
      %430 = vperm.xlu0 %429, %v413
      %v431 = vpop.permute.xlu0 %430
      %v432 = vlaneseq
      %v433 = vshrl.u32 %v432, 7
      %v434 = vadd.s32 %v433, 24
      %435 = vset.pattern.permute.xlu0 %v434
      %436 = vperm.xlu0 %435, %v413
      %v437 = vpop.permute.xlu0 %436
      %v438 = vlaneseq
      %v439 = vshrl.u32 %v438, 7
      %v440 = vadd.s32 %v439, 32
      %441 = vset.pattern.permute.xlu0 %v440
      %442 = vperm.xlu0 %441, %v413
      %v443 = vpop.permute.xlu0 %442
      %v444 = vlaneseq
      %v445 = vshrl.u32 %v444, 7
      %v446 = vadd.s32 %v445, 40
      %447 = vset.pattern.permute.xlu0 %v446
      %448 = vperm.xlu0 %447, %v413
      %v449 = vpop.permute.xlu0 %448
      %v450 = vlaneseq
      %v451 = vshrl.u32 %v450, 7
      %v452 = vadd.s32 %v451, 48
      %453 = vset.pattern.permute.xlu0 %v452
      %454 = vperm.xlu0 %453, %v413
      %v455 = vpop.permute.xlu0 %454
      %v456 = vlaneseq
      %v457 = vshrl.u32 %v456, 7
      %v458 = vadd.s32 %v457, 56
      %459 = vset.pattern.permute.xlu0 %v458
      %460 = vperm.xlu0 %459, %v413
      %v461 = vpop.permute.xlu0 %460
      %v462 = vlaneseq
      %v463 = vshrl.u32 %v462, 7
      %v464 = vadd.s32 %v463, 64
      %465 = vset.pattern.permute.xlu0 %v464
      %466 = vperm.xlu0 %465, %v413
      %v467 = vpop.permute.xlu0 %466
      %v468 = vlaneseq
      %v469 = vshrl.u32 %v468, 7
      %v470 = vadd.s32 %v469, 72
      %471 = vset.pattern.permute.xlu0 %v470
      %472 = vperm.xlu0 %471, %v413
      %v473 = vpop.permute.xlu0 %472
      %v474 = vlaneseq
      %v475 = vshrl.u32 %v474, 7
      %v476 = vadd.s32 %v475, 80
      %477 = vset.pattern.permute.xlu0 %v476
      %478 = vperm.xlu0 %477, %v413
      %v479 = vpop.permute.xlu0 %478
      %v480 = vlaneseq
      %v481 = vshrl.u32 %v480, 7
      %v482 = vadd.s32 %v481, 88
      %483 = vset.pattern.permute.xlu0 %v482
      %484 = vperm.xlu0 %483, %v413
      %v485 = vpop.permute.xlu0 %484
      %v486 = vlaneseq
      %v487 = vshrl.u32 %v486, 7
      %v488 = vadd.s32 %v487, 96
      %489 = vset.pattern.permute.xlu0 %v488
      %490 = vperm.xlu0 %489, %v413
      %v491 = vpop.permute.xlu0 %490
      %v492 = vlaneseq
      %v493 = vshrl.u32 %v492, 7
      %v494 = vadd.s32 %v493, 104
      %495 = vset.pattern.permute.xlu0 %v494
      %496 = vperm.xlu0 %495, %v413
      %v497 = vpop.permute.xlu0 %496
      %v498 = vlaneseq
      %v499 = vshrl.u32 %v498, 7
      %v500 = vadd.s32 %v499, 112
      %501 = vset.pattern.permute.xlu0 %v500
      %502 = vperm.xlu0 %501, %v413
      %v503 = vpop.permute.xlu0 %502
      %v504 = vlaneseq
      %v505 = vshrl.u32 %v504, 7
      %v506 = vadd.s32 %v505, 120
      %507 = vset.pattern.permute.xlu0 %v506
      %508 = vperm.xlu0 %507, %v413
      %v509 = vpop.permute.xlu0 %508
      %v510 = vmul.f32 %v171, %v419
      %v511 = vmul.f32 %v172, %v425
      %v512 = vmul.f32 %v173, %v431
      %v513 = vmul.f32 %v174, %v437
      %v514 = vmul.f32 %v175, %v443
      %v515 = vmul.f32 %v176, %v449
      %v516 = vmul.f32 %v177, %v455
      %v517 = vmul.f32 %v178, %v461
      %v518 = vmul.f32 %v179, %v467
      %v519 = vmul.f32 %v180, %v473
      %v520 = vmul.f32 %v181, %v479
      %v521 = vmul.f32 %v182, %v485
      %v522 = vmul.f32 %v183, %v491
      %v523 = vmul.f32 %v184, %v497
      %v524 = vmul.f32 %v185, %v503
      %v525 = vmul.f32 %v186, %v509
      %526 = vst.msk [vmem:[%s170] sm:$0xff] %vm187, %v510
      %527 = vst.msk [vmem:[%s170 + $0x8] sm:$0xff] %vm187, %v511
      %528 = vst.msk [vmem:[%s170 + $0x10] sm:$0xff] %vm187, %v512
      %529 = vst.msk [vmem:[%s170 + $0x18] sm:$0xff] %vm187, %v513
      %530 = vst.msk [vmem:[%s170 + $0x20] sm:$0xff] %vm187, %v514
      %531 = vst.msk [vmem:[%s170 + $0x28] sm:$0xff] %vm187, %v515
      %532 = vst.msk [vmem:[%s170 + $0x30] sm:$0xff] %vm187, %v516
      %533 = vst.msk [vmem:[%s170 + $0x38] sm:$0xff] %vm187, %v517
      %534 = vst.msk [vmem:[%s170 + $0x40] sm:$0xff] %vm187, %v518
      %535 = vst.msk [vmem:[%s170 + $0x48] sm:$0xff] %vm187, %v519
      %536 = vst.msk [vmem:[%s170 + $0x50] sm:$0xff] %vm187, %v520
      %537 = vst.msk [vmem:[%s170 + $0x58] sm:$0xff] %vm187, %v521
      %538 = vst.msk [vmem:[%s170 + $0x60] sm:$0xff] %vm187, %v522
      %539 = vst.msk [vmem:[%s170 + $0x68] sm:$0xff] %vm187, %v523
      %540 = vst.msk [vmem:[%s170 + $0x70] sm:$0xff] %vm187, %v524
      %541 = vst.msk [vmem:[%s170 + $0x78] sm:$0xff] %vm187, %v525
      %p542 = scmp.lt.s32.totalorder %s14, 1
      %s543 = scalar_select %p542, %s14, 1
      %s544 = smul.addr %s543, 16
      %s545 = smul.addr %s544, 8
      %s546 = scalar_lea.vmem %s3, %s545
      // Predicated region
      $region33: #{tpu_custom_call.1} parent=31 // pred_check
        %p547 = pneg %p100
      $region34: #{tpu_custom_call.1} parent=31 // pred_check_branch
        %549 = sbr.rel (%p547) target = $region36
      $region35: #{tpu_custom_call.1} parent=31 // pred_region
        _
      $region36: #{tpu_custom_call.1} parent=31 // pred_fallthru
        _
    $region32: #{tpu_custom_call.1} parent=5 // pred_fallthru
      _
    %p550 = scmp.le.s32.totalorder 2, %s9
    // Predicated region
    $region37: #{tpu_custom_call.1} parent=5 // pred_check
      %p551 = pneg %p550
    $region38: #{tpu_custom_call.1} parent=5 // pred_check_branch
      %553 = sbr.rel (%p551) target = $region40
    $region39: #{tpu_custom_call.1} parent=5 // pred_region
      %s554 = ssub.s32 %s9, 2
      // Predicated region
      $region41: #{tpu_custom_call.1} parent=39 // pred_check
        %p555 = pneg %p106
      $region42: #{tpu_custom_call.1} parent=39 // pred_check_branch
        %557 = sbr.rel (%p555) target = $region44
      $region43: #{tpu_custom_call.1} parent=39 // pred_region
        %p558 = scmp.lt.s32.totalorder %s15, 1
        %s559 = scalar_select %p558, %s15, 1
        %s560 = smul.addr %s559, 16
        %s561 = smul.addr %s560, 8
        %s562 = scalar_lea.vmem %s3, %s561
      $region44: #{tpu_custom_call.1} parent=39 // pred_fallthru
        _
    $region40: #{tpu_custom_call.1} parent=5 // pred_fallthru
      _
  $region6: #{tpu_custom_call.1} parent=0 // loop_footer
    %s13 = sadd.s32 1, %s9
  $region7: #{tpu_custom_call.1} parent=0 // loop_footer_branch
    %8 = sbr.rel target = $region3
  $region8: #{tpu_custom_call.1} parent=0 // loop_exit
    _

</llo_original>
